<compile_context>
chip_gen: v6e
topology: v6e:2x2x1
jax: 0.10.0
libtpu: 0.0.40
codegen_flags: <defaults>
</compile_context>

<pallas_src>
import jax
import jax.numpy as jnp
from jax.experimental import pallas as pl
from jax.experimental.pallas import tpu as pltpu


def _round_up(x: int, m: int) -> int:
    return ((x + m - 1) // m) * m


def _duration_encoding_kernel(t_ref, e_ref, tbl_ref, o_ref):
    """t_ref:   (tS, 1)  f32 duration values.
    e_ref:   (2, P)   f32 -- row 0 = lower edges (edges shifted right, -inf in lane 0),
                             row 1 = upper edges (+inf in the last real lane and padding).
    tbl_ref: (P, D_pad) f32 zero-padded embedding table.
    o_ref:   (tS, D_pad).

    For each value v, exactly one lane j satisfies lower[j] < v <= upper[j]; that lane is the
    searchsorted(side='left') bucket (clamped to the last real row).  The one-hot is therefore
    two VPU compares and a subtract, and the embedding gather is a one-hot @ table matmul on
    the MXU -- no cross-lane reduce, no iota, no dynamic gather."""
    t = t_ref[...]                                   # (tS, 1)
    e = e_ref[...]                                   # (2, P)
    lo = e[0:1, :]                                   # (1, P)
    hi = e[1:2, :]                                   # (1, P)
    onehot = (lo < t).astype(jnp.float32) - (hi < t).astype(jnp.float32)   # (tS, P)
    o_ref[...] = jnp.dot(onehot, tbl_ref[...],
                         preferred_element_type=jnp.float32).astype(o_ref.dtype)


def _choose_seg_tile(S: int, seg_tile: int) -> int:
    """Sublane-aligned segment tile; prefer >= 2 grid steps when there is enough work so the
    'parallel' axis can shard over both TensorCores on v7x (neutral on single-TC v5e/v6e)."""
    S8 = _round_up(S, 8)
    tS = min(seg_tile, S8)
    if S8 >= 16:
        tS = min(tS, _round_up(-(-S8 // 2), 8))
    return tS


def duration_encoding(time_values: jax.Array, edges_pair: jax.Array,
                      table_pad: jax.Array, out_dim: int, *,
                      seg_tile: int = 512) -> jax.Array:
    """time_values: (S,) f32.  edges_pair: (2, P) pre-padded lower/upper bin edges.
    table_pad: (P, D_pad) pre-padded (zeros) embedding table.  Returns (S, out_dim)."""
    S = int(time_values.shape[0])
    P, D_pad = table_pad.shape
    assert edges_pair.shape == (2, P)
    if S == 0:
        # Mirrors the module's empty-input fallback: zeros((1, dim)).
        return jnp.zeros((1, out_dim), dtype=table_pad.dtype)

    tS = _choose_seg_tile(S, seg_tile)
    S_pad = _round_up(S, tS)

    t2 = time_values.astype(jnp.float32).reshape(S, 1)
    if S_pad != S:
        t2 = jnp.pad(t2, ((0, S_pad - S), (0, 0)))

    out = pl.pallas_call(
        _duration_encoding_kernel,
        out_shape=jax.ShapeDtypeStruct((S_pad, D_pad), table_pad.dtype),
        grid_spec=pltpu.PrefetchScalarGridSpec(
            num_scalar_prefetch=0,
            grid=(S_pad // tS,),
            in_specs=[
                pl.BlockSpec((tS, 1), lambda i: (i, 0)),      # values tile
                pl.BlockSpec((2, P), lambda i: (0, 0)),       # lower/upper edges (broadcast)
                pl.BlockSpec((P, D_pad), lambda i: (0, 0)),   # table (broadcast)
            ],
            out_specs=pl.BlockSpec((tS, D_pad), lambda i: (i, 0)),
        ),
        compiler_params=pltpu.CompilerParams(
            dimension_semantics=("parallel",)),
    )(t2, edges_pair, table_pad)

    if S_pad != S or D_pad != out_dim:
        out = out[:S, :out_dim]
    return out


def _pad_duration_params(edges: jax.Array, table: jax.Array):
    """Pre-pad one (bin_edges, embedding_table) pair for the kernel (done once at init).

    Clamp-to-last-row semantics for values beyond the last bin edge are folded in by treating
    the last real edge as +inf (so the one-hot mass lands on row B-1 instead of a padded row)."""
    B, D = table.shape
    P = _round_up(B, 128)                       # lane-dense one-hot width == table rows
    D_pad = _round_up(D, 128)                   # lane-dense output
    hi = jnp.full((P,), jnp.inf, dtype=jnp.float32)
    hi = hi.at[: B - 1].set(edges[: B - 1].astype(jnp.float32))
    lo = jnp.concatenate([jnp.array([-jnp.inf], dtype=jnp.float32), hi[:-1]])
    edges_pair = jnp.stack([lo, hi], axis=0)    # (2, P)
    table_pad = jnp.pad(table.astype(jnp.float32), ((0, P - B), (0, D_pad - D)))
    return edges_pair, table_pad


def make_duration_encoding_params(key: jax.Array, dim: int):
    """Builds the four (bin_edges, embedding_table) pairs of the module with synthetic,
    deterministic duration pools (stand-in for the JSON + torch.quantile __init__), plus the
    pre-padded kernel operands (padding hoisted out of the per-call hot path)."""
    ks = jax.random.split(key, 8)
    specs = {
        "natural_ab": (101, ks[0], ks[1]),   # torch.range(0,1,0.01) -> 101 quantiles
        "natural_re": (51,  ks[2], ks[3]),   # torch.range(0,1,0.02) -> 51 quantiles
        "ocr_ab":     (101, ks[4], ks[5]),
        "ocr_re":     (51,  ks[6], ks[7]),
    }
    params = {}
    for name, (nq, k_pool, k_emb) in specs.items():
        pool = jax.random.uniform(k_pool, (512,), minval=0.5, maxval=20.0,
                                  dtype=jnp.float32)
        edges = jnp.quantile(pool, jnp.linspace(0.0, 1.0, nq))
        table = 0.02 * jax.random.normal(k_emb, (nq, dim), dtype=jnp.float32)
        edges_pair, table_pad = _pad_duration_params(edges, table)
        params[name] = {"edges": edges, "table": table,
                        "edges_pair": edges_pair, "table_pad": table_pad, "dim": dim}
    return params


def duration_encoding_forward(params, time_values, attribute):
    p = params[attribute]
    return duration_encoding(time_values, p["edges_pair"], p["table_pad"], p["dim"])


def duration_encoding_ref(params, time_values, attribute):
    """Pure-JAX reference mirroring the PyTorch forward (clamping OOB buckets to the last
    embedding row; PyTorch itself would raise for values beyond the last edge)."""
    p = params[attribute]
    edges, table = p["edges"], p["table"]
    if time_values.shape[0] == 0:
        return jnp.zeros((1, table.shape[1]), dtype=table.dtype)
    idx = jnp.searchsorted(edges, time_values.astype(edges.dtype), side="left")
    idx = jnp.clip(idx, 0, table.shape[0] - 1)
    return table[idx]


if __name__ == "__main__":
    key = jax.random.PRNGKey(0)
    dim = 32        # embedding dim
    S = 8           # number of segments

    k_params, k_times = jax.random.split(key)
    params = make_duration_encoding_params(k_params, dim)

    # Deterministic segment durations; overwrite two entries to exercise the below-first-edge
    # and beyond-last-edge (clamp-to-last-row) paths.
    time_values = jax.random.uniform(k_times, (S,), minval=1.0, maxval=19.0,
                                     dtype=jnp.float32)
    time_values = time_values.at[0].set(25.0).at[1].set(0.1)

    ok = True
    for attribute in ("natural_ab", "natural_re", "ocr_ab", "ocr_re"):
        out = jax.block_until_ready(duration_encoding_forward(params, time_values, attribute))
        ref = duration_encoding_ref(params, time_values, attribute)
        ok = ok and out.shape == (S, dim)
        ok = ok and bool(jnp.allclose(out, ref, atol=1e-5, rtol=1e-5))

    # Larger sequence: multi-step grid (>= 2 tiles so "parallel" shards over v7x's 2 TCs).
    big_values = jax.random.uniform(jax.random.PRNGKey(1), (300,), minval=0.2, maxval=25.0,
                                    dtype=jnp.float32)
    out_big = jax.block_until_ready(
        duration_encoding_forward(params, big_values, "natural_ab"))
    ref_big = duration_encoding_ref(params, big_values, "natural_ab")
    ok = ok and out_big.shape == (300, dim)
    ok = ok and bool(jnp.allclose(out_big, ref_big, atol=1e-5, rtol=1e-5))

    # Empty-input fallback path (no kernel launch), as in the module.
    empty = duration_encoding_forward(params, jnp.zeros((0,), jnp.float32), "natural_ab")
    ok = ok and empty.shape == (1, dim)

    assert ok
    print("KERNEL_OK")
</pallas_src>

<mosaic_0001>
module attributes {stable_mosaic.version = 11 : i64} {
  func.func @_duration_encoding_kernel(%arg0: i32, %arg1: memref<8x1xf32, #tpu.memory_space<vmem>>, %arg2: memref<2x128xf32, #tpu.memory_space<vmem>>, %arg3: memref<128x128xf32, #tpu.memory_space<vmem>>, %arg4: memref<8x128xf32, #tpu.memory_space<vmem>>) attributes {dimension_semantics = [#tpu.dimension_semantics<parallel>], iteration_bounds = array<i64: 1>, scalar_prefetch = 0 : i64, scratch_operands = 0 : i64, tpu.core_type = #tpu.core_type<tc>, window_params = [{transform_indices = @transform_0, window_bounds = array<i64: 8, 1>}, {pipeline_mode = #tpu.pipeline_mode<synchronous>, transform_indices = @transform_1, window_bounds = array<i64: 2, 128>}, {pipeline_mode = #tpu.pipeline_mode<synchronous>, transform_indices = @transform_2, window_bounds = array<i64: 128, 128>}, {transform_indices = @transform_3, window_bounds = array<i64: 8, 128>}]} {
    %c0 = arith.constant 0 : index
    %c0_0 = arith.constant 0 : index
    %0 = vector.load %arg1[%c0, %c0_0] : memref<8x1xf32, #tpu.memory_space<vmem>>, vector<8x1xf32>
    %c0_1 = arith.constant 0 : index
    %c0_2 = arith.constant 0 : index
    %1 = vector.load %arg2[%c0_1, %c0_2] : memref<2x128xf32, #tpu.memory_space<vmem>>, vector<2x128xf32>
    %2 = vector.extract_strided_slice %1 {offsets = [0, 0], sizes = [1, 128], strides = [1, 1]} : vector<2x128xf32> to vector<1x128xf32>
    %3 = vector.extract_strided_slice %1 {offsets = [1, 0], sizes = [1, 128], strides = [1, 1]} : vector<2x128xf32> to vector<1x128xf32>
    %4 = vector.broadcast %2 : vector<1x128xf32> to vector<8x128xf32>
    %5 = vector.broadcast %0 : vector<8x1xf32> to vector<8x128xf32>
    %6 = arith.cmpf olt, %4, %5 : vector<8x128xf32>
    %7 = arith.extui %6 : vector<8x128xi1> to vector<8x128xi32>
    %8 = arith.sitofp %7 : vector<8x128xi32> to vector<8x128xf32>
    %9 = vector.broadcast %3 : vector<1x128xf32> to vector<8x128xf32>
    %10 = vector.broadcast %0 : vector<8x1xf32> to vector<8x128xf32>
    %11 = arith.cmpf olt, %9, %10 : vector<8x128xf32>
    %12 = arith.extui %11 : vector<8x128xi1> to vector<8x128xi32>
    %13 = arith.sitofp %12 : vector<8x128xi32> to vector<8x128xf32>
    %14 = arith.subf %8, %13 : vector<8x128xf32>
    %c0_3 = arith.constant 0 : index
    %c0_4 = arith.constant 0 : index
    %15 = vector.load %arg3[%c0_3, %c0_4] : memref<128x128xf32, #tpu.memory_space<vmem>>, vector<128x128xf32>
    %cst = arith.constant dense<0.000000e+00> : vector<8x128xf32>
    %16 = tpu.matmul %14, %15, %cst {dimension_numbers = #tpu.dot_dimension_numbers<[1], [0], [0], [1], [0, 0, 1, 1], [], []>} : vector<8x128xf32>, vector<128x128xf32>, vector<8x128xf32> -> vector<8x128xf32>
    %c0_5 = arith.constant 0 : index
    %c0_6 = arith.constant 0 : index
    %17 = vector.load %arg4[%c0_5, %c0_6] : memref<8x128xf32, #tpu.memory_space<vmem>>, vector<8x128xf32>
    tpu.vector_store %arg4[%c0_5, %c0_6], %16 {strides = array<i32>} : memref<8x128xf32, #tpu.memory_space<vmem>>, vector<8x128xf32>,
    return
  }
  func.func @transform_0(%arg0: i32) -> (i32, i32) {
    %c0_i32 = arith.constant 0 : i32
    %c0_i32_0 = arith.constant 0 : i32
    return %arg0, %c0_i32 : i32, i32
  }
  func.func @transform_1(%arg0: i32) -> (i32, i32) {
    %c0_i32 = arith.constant 0 : i32
    %c0_i32_0 = arith.constant 0 : i32
    %c0_i32_1 = arith.constant 0 : i32
    return %c0_i32, %c0_i32_0 : i32, i32
  }
  func.func @transform_2(%arg0: i32) -> (i32, i32) {
    %c0_i32 = arith.constant 0 : i32
    %c0_i32_0 = arith.constant 0 : i32
    %c0_i32_1 = arith.constant 0 : i32
    return %c0_i32, %c0_i32_0 : i32, i32
  }
  func.func @transform_3(%arg0: i32) -> (i32, i32) {
    %c0_i32 = arith.constant 0 : i32
    %c0_i32_0 = arith.constant 0 : i32
    return %arg0, %c0_i32 : i32, i32
  }
}

</mosaic_0001>

<llo_original>
// kernel: tpu_custom_call.1
$region0: #{tpu_custom_call.1}
  #allocation0 [shape = 'u32[]', space=smem, size = 0x4, offset = 0x4, fixed_abs, tag = 'smem constant byte address 0x4 - core index']
  #allocation1 [shape = 'u32[144,128]{1,0:T(1,128)}', space=vmem, size = 0x12000, scoped, tag = 'internal scratch']
  %s0 = inlined_call_operand.vmem [shape: f32[8,1], index: 0, kind: input, shape index: {}]
  %s1 = inlined_call_operand.vmem [shape: f32[2,128], index: 1, kind: input, shape index: {}]
  %s2 = inlined_call_operand.hbm [shape: f32[128,128], index: 2, kind: input, shape index: {}]
  %s3 = inlined_call_operand.hbm [shape: f32[8,128], index: 3, kind: output, shape index: {}]
  %s4 = sld [smem:[#allocation0]]
  $region26: #{tpu_custom_call.1} parent=0
    _
  %s6 = ssub.s32 1, %s4
  %s7 = scalar_select 0, %s6, %s4
  $region1: #{tpu_custom_call.1} parent=0
    #allocation2 [shape = 'u8[65536]{0}', space=vmem, size = 0x10000, scoped, tag = 'input window, operand 2, single buffered']
    #allocation3 [shape = 's32[1]{0}', space=sflag, size = 0x4, scoped, tag = 'scoped memory for tpu_custom_call.1']
    #allocation4 [shape = 's32[1]{0}', space=sflag, size = 0x4, scoped, tag = 'scoped memory for tpu_custom_call.1']
    #allocation5 [shape = 'u8[4096]{0}', space=vmem, size = 0x1000, scoped, tag = 'output window, operand 0, single buffered']
    %8 = vsyncpa [#allocation3], 0
    %9 = vsyncpa [#allocation4], 0
    // Predicated region
    $region2: #{tpu_custom_call.1} parent=1 // pred_check
      _
    $region3: #{tpu_custom_call.1} parent=1 // pred_check_branch
      %11 = sbr.rel (0) target = $region5
    $region4: #{tpu_custom_call.1} parent=1 // pred_region
      _
    $region5: #{tpu_custom_call.1} parent=1 // pred_fallthru
      _
    // Predicated region
    $region6: #{tpu_custom_call.1} parent=1 // pred_check
      _
    $region7: #{tpu_custom_call.1} parent=1 // pred_check_branch
      %13 = sbr.rel (0) target = $region9
    $region8: #{tpu_custom_call.1} parent=1 // pred_region
      _
    $region9: #{tpu_custom_call.1} parent=1 // pred_fallthru
      _
    // Predicated region
    $region10: #{tpu_custom_call.1} parent=1 // pred_check
      _
    $region11: #{tpu_custom_call.1} parent=1 // pred_check_branch
      %15 = sbr.rel (0) target = $region13
    $region12: #{tpu_custom_call.1} parent=1 // pred_region
      %s17 = ssub.s32 2048, 2048
      %18 = vsyncadd [#allocation3], %s17
      %s19 = sshll.u32 [#allocation2], 4
      %s20 = int_to_ptr.vmem [resolvable:$true] %s19
      %25 = dma.hbm_to_vmem [thread:$0]  %s2, 2048, %s20, [#allocation3], 128, 128, 8
    $region13: #{tpu_custom_call.1} parent=1 // pred_fallthru
      _
    // Predicated region
    $region14: #{tpu_custom_call.1} parent=1 // pred_check
      _
    $region15: #{tpu_custom_call.1} parent=1 // pred_check_branch
      %27 = sbr.rel (0) target = $region17
    $region16: #{tpu_custom_call.1} parent=1 // pred_region
      %28 = dma.done [#allocation3], 2048
    $region17: #{tpu_custom_call.1} parent=1 // pred_fallthru
      _
    %v29 = vld [vmem:[%s0] sm:$0xff]
    %v30 = vld [vmem:[%s1] sm:$0x3]
    %v31 = vlaneseq
    %v32 = vshrl.u32 %v31, 7
    %v33 = vsub.s32 0, %v32
    %v34 = vrot.slane %v30, %v33
    %36 = vset.pattern.permute.xlu0 0
    %37 = vperm.xlu0 %36, %v29
    %v38 = vpop.permute.xlu0 %37
    %vm40 = vcmp.lt.f32.partialorder %v34, %v38
    %v41 = vsel %vm40, 1, 0
    %v42 = vcvt.s32.f32 %v41
    %v43 = vlaneseq
    %v44 = vshrl.u32 %v43, 7
    %v45 = vsub.s32 1, %v44
    %v46 = vrot.slane %v30, %v45
    %vm47 = vcmp.lt.f32.partialorder %v46, %v38
    %v48 = vsel %vm47, 1, 0
    %v49 = vcvt.s32.f32 %v48
    %v50 = vsub.f32 %v42, %v49
    %v51 = vld [vmem:[#allocation2] sm:$0xff]
    %v52 = vld [vmem:[#allocation2 + $0x8] sm:$0xff]
    %v53 = vld [vmem:[#allocation2 + $0x10] sm:$0xff]
    %v54 = vld [vmem:[#allocation2 + $0x18] sm:$0xff]
    %v55 = vld [vmem:[#allocation2 + $0x20] sm:$0xff]
    %v56 = vld [vmem:[#allocation2 + $0x28] sm:$0xff]
    %v57 = vld [vmem:[#allocation2 + $0x30] sm:$0xff]
    %v58 = vld [vmem:[#allocation2 + $0x38] sm:$0xff]
    %v59 = vld [vmem:[#allocation2 + $0x40] sm:$0xff]
    %v60 = vld [vmem:[#allocation2 + $0x48] sm:$0xff]
    %v61 = vld [vmem:[#allocation2 + $0x50] sm:$0xff]
    %v62 = vld [vmem:[#allocation2 + $0x58] sm:$0xff]
    %v63 = vld [vmem:[#allocation2 + $0x60] sm:$0xff]
    %v64 = vld [vmem:[#allocation2 + $0x68] sm:$0xff]
    %v65 = vld [vmem:[#allocation2 + $0x70] sm:$0xff]
    %v66 = vld [vmem:[#allocation2 + $0x78] sm:$0xff]
    %67 = vmatprep.subr.mxu0 0.0
    %68 = vmatpush1.msra.mxu0 %v66
    %69 = vmatprep.subr.mxu0 0.0
    %70 = vmatpush1.msra.mxu0 %v65
    %71 = vmatprep.subr.mxu0 0.0
    %72 = vmatpush1.msra.mxu0 %v64
    %73 = vmatprep.subr.mxu0 0.0
    %74 = vmatpush1.msra.mxu0 %v63
    %75 = vmatprep.subr.mxu0 0.0
    %76 = vmatpush1.msra.mxu0 %v62
    %77 = vmatprep.subr.mxu0 0.0
    %78 = vmatpush1.msra.mxu0 %v61
    %79 = vmatprep.subr.mxu0 0.0
    %80 = vmatpush1.msra.mxu0 %v60
    %81 = vmatprep.subr.mxu0 0.0
    %82 = vmatpush1.msra.mxu0 %v59
    %83 = vmatprep.subr.mxu0 0.0
    %84 = vmatpush1.msra.mxu0 %v58
    %85 = vmatprep.subr.mxu0 0.0
    %86 = vmatpush1.msra.mxu0 %v57
    %87 = vmatprep.subr.mxu0 0.0
    %88 = vmatpush1.msra.mxu0 %v56
    %89 = vmatprep.subr.mxu0 0.0
    %90 = vmatpush1.msra.mxu0 %v55
    %91 = vmatprep.subr.mxu0 0.0
    %92 = vmatpush1.msra.mxu0 %v54
    %93 = vmatprep.subr.mxu0 0.0
    %94 = vmatpush1.msra.mxu0 %v53
    %95 = vmatprep.subr.mxu0 0.0
    %96 = vmatpush1.msra.mxu0 %v52
    %97 = vmatprep.subr.mxu0 0.0
    %98 = vmatpush1.msra.mxu0 %v51
    %99 = vmatprep.subr.mxu0 0.0
    %100 = vmatpush2.msra.mxu0 0.0
    %101 = vmatprep.subr.mxu0 0.0
    %102 = vmatpush2.msra.mxu0 0.0
    %103 = vmatprep.subr.mxu0 0.0
    %104 = vmatpush2.msra.mxu0 0.0
    %105 = vmatprep.subr.mxu0 0.0
    %106 = vmatpush2.msra.mxu0 0.0
    %107 = vmatprep.subr.mxu0 0.0
    %108 = vmatpush2.msra.mxu0 0.0
    %109 = vmatprep.subr.mxu0 0.0
    %110 = vmatpush2.msra.mxu0 0.0
    %111 = vmatprep.subr.mxu0 0.0
    %112 = vmatpush2.msra.mxu0 0.0
    %113 = vmatprep.subr.mxu0 0.0
    %114 = vmatpush2.msra.mxu0 0.0
    %115 = vmatprep.subr.mxu0 0.0
    %116 = vmatpush2.msra.mxu0 0.0
    %117 = vmatprep.subr.mxu0 0.0
    %118 = vmatpush2.msra.mxu0 0.0
    %119 = vmatprep.subr.mxu0 0.0
    %120 = vmatpush2.msra.mxu0 0.0
    %121 = vmatprep.subr.mxu0 0.0
    %122 = vmatpush2.msra.mxu0 0.0
    %123 = vmatprep.subr.mxu0 0.0
    %124 = vmatpush2.msra.mxu0 0.0
    %125 = vmatprep.subr.mxu0 0.0
    %126 = vmatpush2.msra.mxu0 0.0
    %127 = vmatprep.subr.mxu0 0.0
    %128 = vmatpush2.msra.mxu0 0.0
    %129 = vmatprep.subr.mxu0 0.0
    %130 = vmatpush2.msra.mxu0 0.0
    %131 = vmatprep.mubr.f32.mxu0 0.0
    %132 = vmatmul.mubr.f32.gmra.mxu0 %v50
    %v133 = vpop.f32.mrf.mxu0
    %v134 = vadd.f32 0.0, %v133
    %v135 = vpop.f32.mrf.mxu0
    %136 = vdwg.mxu0
    %137 = vst [vmem:[#allocation5] sm:$0xff] %v134
    // Predicated region
    $region18: #{tpu_custom_call.1} parent=1 // pred_check
      _
    $region19: #{tpu_custom_call.1} parent=1 // pred_check_branch
      %139 = sbr.rel (0) target = $region21
    $region20: #{tpu_custom_call.1} parent=1 // pred_region
      %s141 = ssub.s32 128, 128
      %142 = vsyncadd [#allocation4], %s141
      %s144 = sshll.u32 [#allocation5], 4
      %s145 = int_to_ptr.vmem [resolvable:$true] %s144
      %147 = dma.vmem_to_hbm [thread:$0]  %s145, 128, %s3, [#allocation4]
    $region21: #{tpu_custom_call.1} parent=1 // pred_fallthru
      _
    // Predicated region
    $region22: #{tpu_custom_call.1} parent=1 // pred_check
      _
    $region23: #{tpu_custom_call.1} parent=1 // pred_check_branch
      %149 = sbr.rel (0) target = $region25
    $region24: #{tpu_custom_call.1} parent=1 // pred_region
      %150 = dma.done [#allocation4], 128
    $region25: #{tpu_custom_call.1} parent=1 // pred_fallthru
      _
    %151 = vsyncpa [#allocation3], 1
    %152 = vsyncpa [#allocation4], 1

</llo_original>
